<compile_context>
chip_gen: v5e
topology: v5e:2x2
jax: 0.10.0
libtpu: 0.0.40
codegen_flags: <defaults>
</compile_context>

<pallas_src>
import jax
import jax.numpy as jnp
from jax.experimental import pallas as pl
from jax.experimental.pallas import tpu as pltpu


# -----------------------------------------------------------------------------
# Kernel: batch-in-lanes layout.
#   x_ref : (34, TB)  -- features in sublanes, batch in lanes (lane-dense)
#   wK    : (out, in) -- torch nn.Linear layout, used directly as W @ x
#   bK    : (out, 1)  -- broadcast over lanes
#   o_ref : (3, TB)   -- lane-dense store
# -----------------------------------------------------------------------------
def _sigmoid(z):
    # exp and the approximate reciprocal both run on the EUP slot.
    return pl.reciprocal(1.0 + jnp.exp(-z), approx=True)


def _mlp_kernel(x_ref, w1_ref, b1_ref, w2_ref, b2_ref, w3_ref, b3_ref, o_ref):
    x = x_ref[...]                                                 # (34, TB)

    h1 = jnp.dot(w1_ref[...], x, preferred_element_type=jnp.float32)
    h1 = _sigmoid(h1 + b1_ref[...])                                # (20, TB)

    h2 = jnp.dot(w2_ref[...], h1, preferred_element_type=jnp.float32)
    h2 = _sigmoid(h2 + b2_ref[...])                                # (10, TB)

    h3 = jnp.dot(w3_ref[...], h2, preferred_element_type=jnp.float32)
    o_ref[...] = _sigmoid(h3 + b3_ref[...]).astype(o_ref.dtype)    # (3, TB)


def _round_up(n, m):
    return ((n + m - 1) // m) * m


def mynetwork_forward(x, params, *, block_b=1024, stream_dtype=None):
    """Forward pass of MyNetwork.

    x: (B, 34) float32.
    params: torch-style dict: wK is (out_features, in_features), bK is (out_features,).
    block_b: batch tile size target (rounded to a multiple of 128).
    stream_dtype: optionally jnp.bfloat16 to halve the HBM input/weight stream
                  (accumulation stays f32). Default keeps everything f32.
    """
    B, F = x.shape
    assert F == 34

    w1, b1 = params["w1"], params["b1"]
    w2, b2 = params["w2"], params["b2"]
    w3, b3 = params["w3"], params["b3"]

    # Batch tile: multiple of 128 (lane-dense), capped by block_b.
    TB = min(_round_up(block_b, 128), _round_up(B, 128))
    B_pad = _round_up(B, TB)
    grid = (B_pad // TB,)

    if stream_dtype is not None:
        x = x.astype(stream_dtype)
        w1, w2, w3 = (w.astype(stream_dtype) for w in (w1, w2, w3))

    # Layout plumbing in the wrapper: pad batch, put batch into lanes.
    x_t = jnp.pad(x, ((0, B_pad - B), (0, 0))).T                   # (34, B_pad)
    b1c = b1.reshape(-1, 1).astype(jnp.float32)                    # (20, 1)
    b2c = b2.reshape(-1, 1).astype(jnp.float32)                    # (10, 1)
    b3c = b3.reshape(-1, 1).astype(jnp.float32)                    # (3, 1)

    # Weights/biases: constant index_map -> fetched once, VMEM-resident.
    const = lambda shape: pl.BlockSpec(shape, lambda i: (0, 0))

    out_t = pl.pallas_call(
        _mlp_kernel,
        out_shape=jax.ShapeDtypeStruct((3, B_pad), jnp.float32),
        grid=grid,
        in_specs=[
            pl.BlockSpec((34, TB), lambda i: (0, i)),   # streamed activations
            const(w1.shape), const(b1c.shape),
            const(w2.shape), const(b2c.shape),
            const(w3.shape), const(b3c.shape),
        ],
        out_specs=pl.BlockSpec((3, TB), lambda i: (0, i)),
        compiler_params=pltpu.CompilerParams(
            dimension_semantics=("parallel",)),
    )(x_t, w1, b1c, w2, b2c, w3, b3c)

    return out_t.T[:B]                                             # (B, 3)


def init_params(key):
    """Deterministic init mimicking nn.Linear default (uniform +/- 1/sqrt(fan_in)).

    Weights are stored torch-style: (out_features, in_features).
    """
    def linear(key, fan_in, fan_out):
        kw, kb = jax.random.split(key)
        bound = 1.0 / jnp.sqrt(fan_in)
        w = jax.random.uniform(kw, (fan_out, fan_in), jnp.float32, -bound, bound)
        b = jax.random.uniform(kb, (fan_out,), jnp.float32, -bound, bound)
        return w, b

    k1, k2, k3 = jax.random.split(key, 3)
    w1, b1 = linear(k1, 34, 20)
    w2, b2 = linear(k2, 20, 10)
    w3, b3 = linear(k3, 10, 3)
    return {"w1": w1, "b1": b1, "w2": w2, "b2": b2, "w3": w3, "b3": b3}


def _reference(x, p):
    h = jax.nn.sigmoid(x @ p["w1"].T + p["b1"])
    h = jax.nn.sigmoid(h @ p["w2"].T + p["b2"])
    return jax.nn.sigmoid(h @ p["w3"].T + p["b3"])


if __name__ == "__main__":
    key = jax.random.PRNGKey(0)
    kx, kp, kx2 = jax.random.split(key, 3)
    params = init_params(kp)

    # Small demo batch (consistent with the module spec).
    B = 8
    x = jax.random.normal(kx, (B, 34), jnp.float32)
    out = jax.block_until_ready(mynetwork_forward(x, params))
    ref = _reference(x, params)
    assert out.shape == (B, 3)
    # approx reciprocal in the sigmoid -> slightly looser tolerance than f32 exact
    assert jnp.allclose(out, ref, atol=2e-3, rtol=2e-3)

    # Multi-tile case (B not a multiple of the tile) to exercise the batch grid
    # and the padded last block.
    B2 = 300
    x2 = jax.random.normal(kx2, (B2, 34), jnp.float32)
    out2 = jax.block_until_ready(mynetwork_forward(x2, params, block_b=128))
    ref2 = _reference(x2, params)
    assert out2.shape == (B2, 3)
    assert jnp.allclose(out2, ref2, atol=2e-3, rtol=2e-3)

    print("KERNEL_OK")
</pallas_src>

<mosaic_0001>
module attributes {stable_mosaic.version = 11 : i64} {
  func.func @_mlp_kernel(%arg0: i32, %arg1: memref<34x128xf32, #tpu.memory_space<vmem>>, %arg2: memref<20x34xf32, #tpu.memory_space<vmem>>, %arg3: memref<20x1xf32, #tpu.memory_space<vmem>>, %arg4: memref<10x20xf32, #tpu.memory_space<vmem>>, %arg5: memref<10x1xf32, #tpu.memory_space<vmem>>, %arg6: memref<3x10xf32, #tpu.memory_space<vmem>>, %arg7: memref<3x1xf32, #tpu.memory_space<vmem>>, %arg8: memref<3x128xf32, #tpu.memory_space<vmem>>) attributes {dimension_semantics = [#tpu.dimension_semantics<parallel>], iteration_bounds = array<i64: 1>, scalar_prefetch = 0 : i64, scratch_operands = 0 : i64, tpu.core_type = #tpu.core_type<tc>, window_params = [{transform_indices = @transform_0, window_bounds = array<i64: 34, 128>}, {pipeline_mode = #tpu.pipeline_mode<synchronous>, transform_indices = @transform_1, window_bounds = array<i64: 20, 34>}, {pipeline_mode = #tpu.pipeline_mode<synchronous>, transform_indices = @transform_2, window_bounds = array<i64: 20, 1>}, {pipeline_mode = #tpu.pipeline_mode<synchronous>, transform_indices = @transform_3, window_bounds = array<i64: 10, 20>}, {pipeline_mode = #tpu.pipeline_mode<synchronous>, transform_indices = @transform_4, window_bounds = array<i64: 10, 1>}, {pipeline_mode = #tpu.pipeline_mode<synchronous>, transform_indices = @transform_5, window_bounds = array<i64: 3, 10>}, {pipeline_mode = #tpu.pipeline_mode<synchronous>, transform_indices = @transform_6, window_bounds = array<i64: 3, 1>}, {transform_indices = @transform_7, window_bounds = array<i64: 3, 128>}]} {
    %c0 = arith.constant 0 : index
    %c0_0 = arith.constant 0 : index
    %0 = vector.load %arg1[%c0, %c0_0] : memref<34x128xf32, #tpu.memory_space<vmem>>, vector<34x128xf32>
    %c0_1 = arith.constant 0 : index
    %c0_2 = arith.constant 0 : index
    %1 = vector.load %arg2[%c0_1, %c0_2] : memref<20x34xf32, #tpu.memory_space<vmem>>, vector<20x34xf32>
    %cst = arith.constant dense<0.000000e+00> : vector<20x128xf32>
    %2 = tpu.matmul %1, %0, %cst {dimension_numbers = #tpu.dot_dimension_numbers<[1], [0], [0], [1], [0, 0, 1, 1], [], []>} : vector<20x34xf32>, vector<34x128xf32>, vector<20x128xf32> -> vector<20x128xf32>
    %c0_3 = arith.constant 0 : index
    %c0_4 = arith.constant 0 : index
    %3 = vector.load %arg3[%c0_3, %c0_4] : memref<20x1xf32, #tpu.memory_space<vmem>>, vector<20x1xf32>
    %4 = vector.broadcast %3 : vector<20x1xf32> to vector<20x128xf32>
    %5 = arith.addf %2, %4 : vector<20x128xf32>
    %cst_5 = arith.constant 0.000000e+00 : f32
    %6 = vector.broadcast %cst_5 : f32 to vector<20x128xf32>
    %7 = arith.subf %6, %5 : vector<20x128xf32>
    %8 = math.exp %7 : vector<20x128xf32>
    %cst_6 = arith.constant 1.000000e+00 : f32
    %9 = vector.broadcast %cst_6 : f32 to vector<20x128xf32>
    %10 = arith.addf %9, %8 : vector<20x128xf32>
    %11 = tpu.reciprocal %10 {approx = true} : vector<20x128xf32> -> vector<20x128xf32>
    %c0_7 = arith.constant 0 : index
    %c0_8 = arith.constant 0 : index
    %12 = vector.load %arg4[%c0_7, %c0_8] : memref<10x20xf32, #tpu.memory_space<vmem>>, vector<10x20xf32>
    %cst_9 = arith.constant dense<0.000000e+00> : vector<10x128xf32>
    %13 = tpu.matmul %12, %11, %cst_9 {dimension_numbers = #tpu.dot_dimension_numbers<[1], [0], [0], [1], [0, 0, 1, 1], [], []>} : vector<10x20xf32>, vector<20x128xf32>, vector<10x128xf32> -> vector<10x128xf32>
    %c0_10 = arith.constant 0 : index
    %c0_11 = arith.constant 0 : index
    %14 = vector.load %arg5[%c0_10, %c0_11] : memref<10x1xf32, #tpu.memory_space<vmem>>, vector<10x1xf32>
    %15 = vector.broadcast %14 : vector<10x1xf32> to vector<10x128xf32>
    %16 = arith.addf %13, %15 : vector<10x128xf32>
    %cst_12 = arith.constant 0.000000e+00 : f32
    %17 = vector.broadcast %cst_12 : f32 to vector<10x128xf32>
    %18 = arith.subf %17, %16 : vector<10x128xf32>
    %19 = math.exp %18 : vector<10x128xf32>
    %cst_13 = arith.constant 1.000000e+00 : f32
    %20 = vector.broadcast %cst_13 : f32 to vector<10x128xf32>
    %21 = arith.addf %20, %19 : vector<10x128xf32>
    %22 = tpu.reciprocal %21 {approx = true} : vector<10x128xf32> -> vector<10x128xf32>
    %c0_14 = arith.constant 0 : index
    %c0_15 = arith.constant 0 : index
    %23 = vector.load %arg6[%c0_14, %c0_15] : memref<3x10xf32, #tpu.memory_space<vmem>>, vector<3x10xf32>
    %cst_16 = arith.constant dense<0.000000e+00> : vector<3x128xf32>
    %24 = tpu.matmul %23, %22, %cst_16 {dimension_numbers = #tpu.dot_dimension_numbers<[1], [0], [0], [1], [0, 0, 1, 1], [], []>} : vector<3x10xf32>, vector<10x128xf32>, vector<3x128xf32> -> vector<3x128xf32>
    %c0_17 = arith.constant 0 : index
    %c0_18 = arith.constant 0 : index
    %25 = vector.load %arg7[%c0_17, %c0_18] : memref<3x1xf32, #tpu.memory_space<vmem>>, vector<3x1xf32>
    %26 = vector.broadcast %25 : vector<3x1xf32> to vector<3x128xf32>
    %27 = arith.addf %24, %26 : vector<3x128xf32>
    %cst_19 = arith.constant 0.000000e+00 : f32
    %28 = vector.broadcast %cst_19 : f32 to vector<3x128xf32>
    %29 = arith.subf %28, %27 : vector<3x128xf32>
    %30 = math.exp %29 : vector<3x128xf32>
    %cst_20 = arith.constant 1.000000e+00 : f32
    %31 = vector.broadcast %cst_20 : f32 to vector<3x128xf32>
    %32 = arith.addf %31, %30 : vector<3x128xf32>
    %33 = tpu.reciprocal %32 {approx = true} : vector<3x128xf32> -> vector<3x128xf32>
    %c0_21 = arith.constant 0 : index
    %c0_22 = arith.constant 0 : index
    %34 = vector.load %arg8[%c0_21, %c0_22] : memref<3x128xf32, #tpu.memory_space<vmem>>, vector<3x128xf32>
    tpu.vector_store %arg8[%c0_21, %c0_22], %33 {strides = array<i32>} : memref<3x128xf32, #tpu.memory_space<vmem>>, vector<3x128xf32>,
    return
  }
  func.func @transform_0(%arg0: i32) -> (i32, i32) {
    %c0_i32 = arith.constant 0 : i32
    %c0_i32_0 = arith.constant 0 : i32
    return %c0_i32, %arg0 : i32, i32
  }
  func.func @transform_1(%arg0: i32) -> (i32, i32) {
    %c0_i32 = arith.constant 0 : i32
    %c0_i32_0 = arith.constant 0 : i32
    %c0_i32_1 = arith.constant 0 : i32
    return %c0_i32, %c0_i32_0 : i32, i32
  }
  func.func @transform_2(%arg0: i32) -> (i32, i32) {
    %c0_i32 = arith.constant 0 : i32
    %c0_i32_0 = arith.constant 0 : i32
    %c0_i32_1 = arith.constant 0 : i32
    return %c0_i32, %c0_i32_0 : i32, i32
  }
  func.func @transform_3(%arg0: i32) -> (i32, i32) {
    %c0_i32 = arith.constant 0 : i32
    %c0_i32_0 = arith.constant 0 : i32
    %c0_i32_1 = arith.constant 0 : i32
    return %c0_i32, %c0_i32_0 : i32, i32
  }
  func.func @transform_4(%arg0: i32) -> (i32, i32) {
    %c0_i32 = arith.constant 0 : i32
    %c0_i32_0 = arith.constant 0 : i32
    %c0_i32_1 = arith.constant 0 : i32
    return %c0_i32, %c0_i32_0 : i32, i32
  }
  func.func @transform_5(%arg0: i32) -> (i32, i32) {
    %c0_i32 = arith.constant 0 : i32
    %c0_i32_0 = arith.constant 0 : i32
    %c0_i32_1 = arith.constant 0 : i32
    return %c0_i32, %c0_i32_0 : i32, i32
  }
  func.func @transform_6(%arg0: i32) -> (i32, i32) {
    %c0_i32 = arith.constant 0 : i32
    %c0_i32_0 = arith.constant 0 : i32
    %c0_i32_1 = arith.constant 0 : i32
    return %c0_i32, %c0_i32_0 : i32, i32
  }
  func.func @transform_7(%arg0: i32) -> (i32, i32) {
    %c0_i32 = arith.constant 0 : i32
    %c0_i32_0 = arith.constant 0 : i32
    return %c0_i32, %arg0 : i32, i32
  }
}

</mosaic_0001>

<llo_original>
// kernel: tpu_custom_call.1
$region0: #{tpu_custom_call.1}
  #allocation0 [shape = 'u32[]', space=smem, size = 0x4, offset = 0x4, fixed_abs, tag = 'smem constant byte address 0x4 - core index']
  #allocation1 [shape = 'u32[72,128]{1,0:T(1,128)}', space=vmem, size = 0x9000, scoped, tag = 'internal scratch']
  %s0 = inlined_call_operand.vmem [shape: f32[34,128], index: 0, kind: input, shape index: {}]
  %s1 = inlined_call_operand.hbm [shape: f32[20,34], index: 1, kind: input, shape index: {}]
  %s2 = inlined_call_operand.vmem [shape: f32[20,1], index: 2, kind: input, shape index: {}]
  %s3 = inlined_call_operand.hbm [shape: f32[10,20], index: 3, kind: input, shape index: {}]
  %s4 = inlined_call_operand.vmem [shape: f32[10,1], index: 4, kind: input, shape index: {}]
  %s5 = inlined_call_operand.vmem [shape: f32[3,10], index: 5, kind: input, shape index: {}]
  %s6 = inlined_call_operand.vmem [shape: f32[3,1], index: 6, kind: input, shape index: {}]
  %s7 = inlined_call_operand.hbm [shape: f32[3,128], index: 7, kind: output, shape index: {}]
  %s8 = sld [smem:[#allocation0]]
  $region46: #{tpu_custom_call.1} parent=0
    _
  %s10 = ssub.s32 1, %s8
  %s11 = scalar_select 0, %s10, %s8
  $region1: #{tpu_custom_call.1} parent=0
    #allocation2 [shape = 'u8[12288]{0}', space=vmem, size = 0x3000, scoped, tag = 'input window, operand 1, single buffered']
    #allocation3 [shape = 's32[1]{0}', space=sflag, size = 0x4, scoped, tag = 'scoped memory for tpu_custom_call.1']
    #allocation4 [shape = 's32[1]{0}', space=sflag, size = 0x4, scoped, tag = 'scoped memory for tpu_custom_call.1']
    #allocation5 [shape = 'u8[8192]{0}', space=vmem, size = 0x2000, scoped, tag = 'input window, operand 3, single buffered']
    #allocation6 [shape = 's32[1]{0}', space=sflag, size = 0x4, scoped, tag = 'scoped memory for tpu_custom_call.1']
    #allocation7 [shape = 'u8[2048]{0}', space=vmem, size = 0x800, scoped, tag = 'output window, operand 0, single buffered']
    %12 = vsyncpa [#allocation3], 0
    %13 = vsyncpa [#allocation6], 0
    %14 = vsyncpa [#allocation4], 0
    // Predicated region
    $region2: #{tpu_custom_call.1} parent=1 // pred_check
      _
    $region3: #{tpu_custom_call.1} parent=1 // pred_check_branch
      %16 = sbr.rel (0) target = $region5
    $region4: #{tpu_custom_call.1} parent=1 // pred_region
      _
    $region5: #{tpu_custom_call.1} parent=1 // pred_fallthru
      _
    // Predicated region
    $region6: #{tpu_custom_call.1} parent=1 // pred_check
      _
    $region7: #{tpu_custom_call.1} parent=1 // pred_check_branch
      %18 = sbr.rel (0) target = $region9
    $region8: #{tpu_custom_call.1} parent=1 // pred_region
      %20 = vsyncadd [#allocation3], 0
      %s21 = sshll.u32 %s1, 4
      %s22 = int_to_ptr.hbm [resolvable:$true] %s21
      %s23 = sshll.u32 [#allocation2], 4
      %s24 = int_to_ptr.vmem [resolvable:$true] %s23
      %29 = dma.hbm_to_vmem [thread:$0]  %s22, 384, %s24, [#allocation3], 128, 128, 8
    $region9: #{tpu_custom_call.1} parent=1 // pred_fallthru
      _
    // Predicated region
    $region10: #{tpu_custom_call.1} parent=1 // pred_check
      _
    $region11: #{tpu_custom_call.1} parent=1 // pred_check_branch
      %31 = sbr.rel (0) target = $region13
    $region12: #{tpu_custom_call.1} parent=1 // pred_region
      _
    $region13: #{tpu_custom_call.1} parent=1 // pred_fallthru
      _
    // Predicated region
    $region14: #{tpu_custom_call.1} parent=1 // pred_check
      _
    $region15: #{tpu_custom_call.1} parent=1 // pred_check_branch
      %33 = sbr.rel (0) target = $region17
    $region16: #{tpu_custom_call.1} parent=1 // pred_region
      %35 = vsyncadd [#allocation6], 0
      %s36 = sshll.u32 %s3, 4
      %s37 = int_to_ptr.hbm [resolvable:$true] %s36
      %s38 = sshll.u32 [#allocation5], 4
      %s39 = int_to_ptr.vmem [resolvable:$true] %s38
      %44 = dma.hbm_to_vmem [thread:$0]  %s37, 256, %s39, [#allocation6], 128, 128, 8
    $region17: #{tpu_custom_call.1} parent=1 // pred_fallthru
      _
    // Predicated region
    $region18: #{tpu_custom_call.1} parent=1 // pred_check
      _
    $region19: #{tpu_custom_call.1} parent=1 // pred_check_branch
      %46 = sbr.rel (0) target = $region21
    $region20: #{tpu_custom_call.1} parent=1 // pred_region
      _
    $region21: #{tpu_custom_call.1} parent=1 // pred_fallthru
      _
    // Predicated region
    $region22: #{tpu_custom_call.1} parent=1 // pred_check
      _
    $region23: #{tpu_custom_call.1} parent=1 // pred_check_branch
      %48 = sbr.rel (0) target = $region25
    $region24: #{tpu_custom_call.1} parent=1 // pred_region
      _
    $region25: #{tpu_custom_call.1} parent=1 // pred_fallthru
      _
    // Predicated region
    $region26: #{tpu_custom_call.1} parent=1 // pred_check
      _
    $region27: #{tpu_custom_call.1} parent=1 // pred_check_branch
      %50 = sbr.rel (0) target = $region29
    $region28: #{tpu_custom_call.1} parent=1 // pred_region
      _
    $region29: #{tpu_custom_call.1} parent=1 // pred_fallthru
      _
    // Predicated region
    $region30: #{tpu_custom_call.1} parent=1 // pred_check
      _
    $region31: #{tpu_custom_call.1} parent=1 // pred_check_branch
      %52 = sbr.rel (0) target = $region33
    $region32: #{tpu_custom_call.1} parent=1 // pred_region
      %54 = dma.done [#allocation3], 384
    $region33: #{tpu_custom_call.1} parent=1 // pred_fallthru
      _
    // Predicated region
    $region34: #{tpu_custom_call.1} parent=1 // pred_check
      _
    $region35: #{tpu_custom_call.1} parent=1 // pred_check_branch
      %56 = sbr.rel (0) target = $region37
    $region36: #{tpu_custom_call.1} parent=1 // pred_region
      %58 = dma.done [#allocation6], 256
    $region37: #{tpu_custom_call.1} parent=1 // pred_fallthru
      _
    %v59 = vld [vmem:[%s0] sm:$0xff]
    %v60 = vld [vmem:[%s0 + $0x8] sm:$0xff]
    %v61 = vld [vmem:[%s0 + $0x10] sm:$0xff]
    %v62 = vld [vmem:[%s0 + $0x18] sm:$0xff]
    %v63 = vld [vmem:[%s0 + $0x20] sm:$0x3]
    %v64 = vld [vmem:[#allocation2] sm:$0xff]
    %v65 = vld [vmem:[#allocation2 + $0x8] sm:$0xff]
    %v66 = vld [vmem:[#allocation2 + $0x10] sm:$0xf]
    %v67 = vld [vmem:[%s2] sm:$0xff]
    %v68 = vld [vmem:[%s2 + $0x8] sm:$0xff]
    %v69 = vld [vmem:[%s2 + $0x10] sm:$0xf]
    %71 = vset.pattern.permute.xlu0 0
    %72 = vperm.xlu0 %71, %v67
    %v73 = vpop.permute.xlu0 %72
    %76 = vset.pattern.permute.xlu0 0
    %77 = vperm.xlu0 %76, %v68
    %v78 = vpop.permute.xlu0 %77
    %81 = vset.pattern.permute.xlu0 0
    %82 = vperm.xlu0 %81, %v69
    %v83 = vpop.permute.xlu0 %82
    %vm85 = vcmask 277504
    %v87 = vsel %vm85, %v64, 0
    %v90 = vsel %vm85, %v65, 0
    %v93 = vsel %vm85, %v66, 0
    %vm95 = vcmask 1041408
    %v97 = vsel %vm95, %v63, 0
    %99 = vmatpush.msra.mxu0 0.0
    %100 = vmatpush.msra.mxu0 0.0
    %101 = vmatpush.msra.mxu0 0.0
    %102 = vmatpush.msra.mxu0 0.0
    %103 = vmatpush.msra.mxu0 0.0
    %104 = vmatpush.msra.mxu0 0.0
    %105 = vmatpush.msra.mxu0 0.0
    %106 = vmatpush.msra.mxu0 0.0
    %107 = vmatpush.msra.mxu0 0.0
    %108 = vmatpush.msra.mxu0 0.0
    %109 = vmatpush.msra.mxu0 0.0
    %110 = vmatpush.msra.mxu0 %v97
    %111 = vmatpush.msra.mxu0 %v62
    %112 = vmatpush.msra.mxu0 %v61
    %113 = vmatpush.msra.mxu0 %v60
    %114 = vmatpush.msra.mxu0 %v59
    %115 = vmatmul.f32.gmra.mxu0 %v87
    %v116 = vpop.f32.mrf.mxu0
    %v117 = vadd.f32 %v73, %v116
    %118 = vmatmul.f32.gmra.mxu0 %v90
    %v119 = vpop.f32.mrf.mxu0
    %v120 = vadd.f32 %v78, %v119
    %121 = vmatmul.f32.gmra.mxu0 %v93
    %v122 = vpop.f32.mrf.mxu0
    %v123 = vadd.f32 %v83, %v122
    %124 = vdwg.mxu0
    %v125 = vsub.f32 0.0, %v117
    %v126 = vsub.f32 0.0, %v120
    %v127 = vsub.f32 0.0, %v123
    %v128 = vmul.f32 %v125, 1.442695
    %v129 = vpow.pop %v128
    %v130 = vmul.f32 %v126, 1.442695
    %v131 = vpow.pop %v130
    %v132 = vmul.f32 %v127, 1.442695
    %v133 = vpow.pop %v132
    %v134 = vadd.f32 %v129, 1.0
    %v135 = vadd.f32 %v131, 1.0
    %v136 = vadd.f32 %v133, 1.0
    %v137 = vrcp.pop %v134
    %v138 = vrcp.pop %v135
    %v139 = vrcp.pop %v136
    %v140 = vld [vmem:[#allocation5] sm:$0xff]
    %v141 = vld [vmem:[#allocation5 + $0x8] sm:$0x3]
    %v142 = vld [vmem:[%s4] sm:$0xff]
    %v143 = vld [vmem:[%s4 + $0x8] sm:$0x3]
    %145 = vset.pattern.permute.xlu0 0
    %146 = vperm.xlu0 %145, %v142
    %v147 = vpop.permute.xlu0 %146
    %150 = vset.pattern.permute.xlu0 0
    %151 = vperm.xlu0 %150, %v143
    %v152 = vpop.permute.xlu0 %151
    %vm154 = vcmask 162816
    %v156 = vsel %vm154, %v140, 0
    %v159 = vsel %vm154, %v141, 0
    %vm161 = vcmask 1043456
    %v163 = vsel %vm161, %v139, 0
    %165 = vmatpush.msra.mxu0 0.0
    %166 = vmatpush.msra.mxu0 0.0
    %167 = vmatpush.msra.mxu0 0.0
    %168 = vmatpush.msra.mxu0 0.0
    %169 = vmatpush.msra.mxu0 0.0
    %170 = vmatpush.msra.mxu0 0.0
    %171 = vmatpush.msra.mxu0 0.0
    %172 = vmatpush.msra.mxu0 0.0
    %173 = vmatpush.msra.mxu0 0.0
    %174 = vmatpush.msra.mxu0 0.0
    %175 = vmatpush.msra.mxu0 0.0
    %176 = vmatpush.msra.mxu0 0.0
    %177 = vmatpush.msra.mxu0 0.0
    %178 = vmatpush.msra.mxu0 %v163
    %179 = vmatpush.msra.mxu0 %v138
    %180 = vmatpush.msra.mxu0 %v137
    %181 = vmatmul.f32.gmra.mxu0 %v156
    %v182 = vpop.f32.mrf.mxu0
    %v183 = vadd.f32 %v147, %v182
    %184 = vmatmul.f32.gmra.mxu0 %v159
    %v185 = vpop.f32.mrf.mxu0
    %v186 = vadd.f32 %v152, %v185
    %187 = vdwg.mxu0
    %v188 = vsub.f32 0.0, %v183
    %v189 = vsub.f32 0.0, %v186
    %v190 = vmul.f32 %v188, 1.442695
    %v191 = vpow.pop %v190
    %v192 = vmul.f32 %v189, 1.442695
    %v193 = vpow.pop %v192
    %v194 = vadd.f32 %v191, 1.0
    %v195 = vadd.f32 %v193, 1.0
    %v196 = vrcp.pop %v194
    %v197 = vrcp.pop %v195
    %v198 = vld [vmem:[%s5] sm:$0x7]
    %v199 = vld [vmem:[%s6] sm:$0x7]
    %201 = vset.pattern.permute.xlu0 0
    %202 = vperm.xlu0 %201, %v199
    %v203 = vpop.permute.xlu0 %202
    %vm205 = vcmask 80896
    %v207 = vsel %vm205, %v198, 0
    %v210 = vsel %vm95, %v197, 0
    %212 = vmatpush.msra.mxu0 0.0
    %213 = vmatpush.msra.mxu0 0.0
    %214 = vmatpush.msra.mxu0 0.0
    %215 = vmatpush.msra.mxu0 0.0
    %216 = vmatpush.msra.mxu0 0.0
    %217 = vmatpush.msra.mxu0 0.0
    %218 = vmatpush.msra.mxu0 0.0
    %219 = vmatpush.msra.mxu0 0.0
    %220 = vmatpush.msra.mxu0 0.0
    %221 = vmatpush.msra.mxu0 0.0
    %222 = vmatpush.msra.mxu0 0.0
    %223 = vmatpush.msra.mxu0 0.0
    %224 = vmatpush.msra.mxu0 0.0
    %225 = vmatpush.msra.mxu0 0.0
    %226 = vmatpush.msra.mxu0 %v210
    %227 = vmatpush.msra.mxu0 %v196
    %228 = vmatmul.f32.gmra.mxu0 %v207
    %v229 = vpop.f32.mrf.mxu0
    %v230 = vadd.f32 %v203, %v229
    %231 = vdwg.mxu0
    %v232 = vsub.f32 0.0, %v230
    %v233 = vmul.f32 %v232, 1.442695
    %v234 = vpow.pop %v233
    %v235 = vadd.f32 %v234, 1.0
    %v236 = vrcp.pop %v235
    %237 = vst [vmem:[#allocation7] sm:$0x7] %v236
    // Predicated region
    $region38: #{tpu_custom_call.1} parent=1 // pred_check
      _
    $region39: #{tpu_custom_call.1} parent=1 // pred_check_branch
      %239 = sbr.rel (0) target = $region41
    $region40: #{tpu_custom_call.1} parent=1 // pred_region
      %241 = vsyncadd [#allocation4], 0
      %s243 = sshll.u32 [#allocation7], 4
      %s244 = int_to_ptr.vmem [resolvable:$true] %s243
      %s245 = sshll.u32 %s7, 4
      %s246 = int_to_ptr.hbm [resolvable:$true] %s245
      %248 = dma.vmem_to_hbm [thread:$0]  %s244, 64, %s246, [#allocation4]
    $region41: #{tpu_custom_call.1} parent=1 // pred_fallthru
      _
    // Predicated region
    $region42: #{tpu_custom_call.1} parent=1 // pred_check
      _
    $region43: #{tpu_custom_call.1} parent=1 // pred_check_branch
      %250 = sbr.rel (0) target = $region45
    $region44: #{tpu_custom_call.1} parent=1 // pred_region
      %252 = dma.done [#allocation4], 64
    $region45: #{tpu_custom_call.1} parent=1 // pred_fallthru
      _
    %253 = vsyncpa [#allocation3], 1
    %254 = vsyncpa [#allocation6], 1
    %255 = vsyncpa [#allocation4], 1

</llo_original>
